<compile_context>
chip_gen: v6e
topology: v6e:2x2x1
jax: 0.10.0
libtpu: 0.0.40
codegen_flags: <defaults>
</compile_context>

<pallas_src>
import jax
import jax.numpy as jnp
from jax.experimental import pallas as pl
from jax.experimental.pallas import tpu as pltpu

_LANE = 128
_SUBLANE = 8
_F32_BYTES = 4


# ----------------------------- kernel -------------------------------------- #

def _custom_linear_kernel(x_ref, w_ref, b_ref, o_ref):
    # x_ref / o_ref: (tb, tf) lane-dense tiles (tf on the 128-lane axis).
    # w_ref / b_ref: (1, tf) -> sublane broadcast on the VPU (no XLU relayout).
    # Memory-bound streaming FMA: do not reorder / add pipelining depth here.
    o_ref[...] = x_ref[...] * w_ref[...] + b_ref[...]


# ----------------------------- tiling -------------------------------------- #

def _vmem_budgets():
    """(vmem_limit_bytes, tile_budget_bytes), generation-aware."""
    phys = 64 * 1024 * 1024                      # conservative default (v7x per-TC)
    try:
        phys = int(getattr(pltpu.get_tpu_info(), "vmem_capacity_bytes", phys))
    except Exception:                            # interpret mode / unknown chip
        pass
    if phys >= 128 * 1024 * 1024:                # v5e / v6e
        return 64 * 1024 * 1024, 48 * 1024 * 1024
    return 32 * 1024 * 1024, 24 * 1024 * 1024    # v7x


def _pick_tiles(B, F, budget):
    """Pick (tb, tf) tiles for the flat (B, F) layout.

    F is a multiple of 128 (wrapper pads), so the byte estimates are exact:
    no hidden lane padding.  Streamed x/out tiles and the (1, tf) params
    (padded to 8 sublanes in VMEM) are all double-buffered by Pallas.
    """
    def footprint(tb, tf):
        stream = 2 * (tb * tf) * _F32_BYTES * 2            # (x + out) * dbuf
        resident = 2 * (_SUBLANE * tf) * _F32_BYTES * 2    # (w + b)  * dbuf
        return stream + resident

    # Feature tile: whole F if an 8-row tile fits, else shrink in 128-lane steps.
    tf = F
    while tf > _LANE and footprint(_SUBLANE, tf) > budget:
        tf = max(_LANE, ((tf // 2) // _LANE) * _LANE)

    # Batch tile: fill the remaining budget (big tiles amortize ~0.35us/step).
    resident = 2 * (_SUBLANE * tf) * _F32_BYTES * 2
    tb = max(_SUBLANE, (budget - resident) // (2 * 2 * tf * _F32_BYTES))

    # Keep >= 2 batch steps when possible so the "parallel" batch axis can be
    # sharded across both TensorCores on v7x (no-op on v5e/v6e single-TC chips).
    if B >= 2 * _SUBLANE:
        tb = min(tb, max(_SUBLANE, (B // 2 // _SUBLANE) * _SUBLANE))

    if tb >= B:
        tb = B                                   # single full block
    else:
        tb = max(_SUBLANE, (tb // _SUBLANE) * _SUBLANE)
    return tb, tf


# ----------------------------- wrapper -------------------------------------- #

def custom_linear(x, weights, bias):
    """x: (B, N) f32; weights/bias: (N, C) f32 -> (B, N, C) f32."""
    B, N = x.shape
    N_w, C = weights.shape
    assert N == N_w and bias.shape == (N, C)

    F = N * C
    # Flatten to a lane-dense (B, F) problem: flat index f = n*C + c.
    if C == 1:
        x_flat = x
    else:
        # Broadcast x across code_dim in the wrapper (one HBM pass) so the
        # kernel keeps unmasked full-lane stores -- the big lever on C>1.
        # TODO(synk): an in-kernel lane interleave would save this pass, but
        # Mosaic has no cheap lane-repeat; the XLU relayout it implies is what
        # we are removing here.
        x_flat = jnp.repeat(x, C, axis=1)
    w_flat = weights.reshape(1, F)
    b_flat = bias.reshape(1, F)

    # Pad the feature axis to a 128-lane multiple so every vld/vst is unmasked;
    # the padded tail is sliced off after the kernel.
    F_pad = F if F % _LANE == 0 else ((F + _LANE - 1) // _LANE) * _LANE
    if F_pad != F:
        pad = ((0, 0), (0, F_pad - F))
        x_flat = jnp.pad(x_flat, pad)
        w_flat = jnp.pad(w_flat, pad)
        b_flat = jnp.pad(b_flat, pad)

    vmem_limit, tile_budget = _vmem_budgets()
    tb, tf = _pick_tiles(B, F_pad, tile_budget)
    grid = (pl.cdiv(B, tb), pl.cdiv(F_pad, tf))

    out_flat = pl.pallas_call(
        _custom_linear_kernel,
        out_shape=jax.ShapeDtypeStruct((B, F_pad), x.dtype),
        grid=grid,
        in_specs=[
            pl.BlockSpec((tb, tf), lambda i, j: (i, j)),   # x: streamed
            pl.BlockSpec((1, tf), lambda i, j: (0, j)),    # weights: resident per j
            pl.BlockSpec((1, tf), lambda i, j: (0, j)),    # bias: resident per j
        ],
        out_specs=pl.BlockSpec((tb, tf), lambda i, j: (i, j)),
        compiler_params=pltpu.CompilerParams(
            dimension_semantics=("parallel", "parallel"),
            vmem_limit_bytes=vmem_limit,
        ),
    )(x_flat, w_flat, b_flat)

    if F_pad != F:
        out_flat = out_flat[:, :F]
    return out_flat.reshape(B, N, C)


def init_params(key, input_size, code_dim=1, dtype=jnp.float32):
    """Deterministic re-implementation of CustomLinear.__init__ parameter init."""
    kw, kb = jax.random.split(key)
    weights = jax.random.normal(kw, (input_size, code_dim), dtype) * 0.1 + 1.0
    weights = jnp.clip(weights, 0.8, 1.2)
    bias = jax.random.normal(kb, (input_size, code_dim), dtype) * 0.1
    bias = jnp.clip(bias, -0.2, 0.2)
    return weights, bias


# ------------------------------- test --------------------------------------- #

if __name__ == "__main__":
    key = jax.random.PRNGKey(0)
    k_x, k_p1, k_p2, k_p3 = jax.random.split(key, 4)

    # (B, N, C): module-default code_dim=1 (padded-lane path), code_dim=4
    # (lane-dense flat path), and a multi-batch-tile case (2 grid steps).
    cases = [
        (8, 32, 1, k_p1),
        (8, 32, 4, k_p2),
        (32, 256, 1, k_p3),
    ]
    for B, N, C, k_p in cases:
        kx = jax.random.fold_in(k_x, B * 131 + N * 7 + C)
        x = jax.random.normal(kx, (B, N), jnp.float32)
        weights, bias = init_params(k_p, N, C)
        out = jax.block_until_ready(custom_linear(x, weights, bias))
        ref = x[:, :, None] * weights[None, :, :] + bias[None, :, :]
        assert out.shape == (B, N, C)
        assert jnp.allclose(out, ref, atol=1e-6, rtol=1e-6)

    print("KERNEL_OK")
</pallas_src>

<mosaic_0001>
module attributes {stable_mosaic.version = 11 : i64} {
  func.func @_custom_linear_kernel(%arg0: i32, %arg1: i32, %arg2: memref<8x128xf32, #tpu.memory_space<vmem>>, %arg3: memref<1x128xf32, #tpu.memory_space<vmem>>, %arg4: memref<1x128xf32, #tpu.memory_space<vmem>>, %arg5: memref<8x128xf32, #tpu.memory_space<vmem>>) attributes {dimension_semantics = [#tpu.dimension_semantics<parallel>, #tpu.dimension_semantics<parallel>], iteration_bounds = array<i64: 1, 1>, scalar_prefetch = 0 : i64, scratch_operands = 0 : i64, tpu.core_type = #tpu.core_type<tc>, window_params = [{transform_indices = @transform_0, window_bounds = array<i64: 8, 128>}, {transform_indices = @transform_1, window_bounds = array<i64: 1, 128>}, {transform_indices = @transform_2, window_bounds = array<i64: 1, 128>}, {transform_indices = @transform_3, window_bounds = array<i64: 8, 128>}]} {
    %c0 = arith.constant 0 : index
    %c0_0 = arith.constant 0 : index
    %0 = vector.load %arg2[%c0, %c0_0] : memref<8x128xf32, #tpu.memory_space<vmem>>, vector<8x128xf32>
    %c0_1 = arith.constant 0 : index
    %c0_2 = arith.constant 0 : index
    %1 = vector.load %arg3[%c0_1, %c0_2] : memref<1x128xf32, #tpu.memory_space<vmem>>, vector<1x128xf32>
    %2 = vector.broadcast %1 : vector<1x128xf32> to vector<8x128xf32>
    %3 = arith.mulf %0, %2 : vector<8x128xf32>
    %c0_3 = arith.constant 0 : index
    %c0_4 = arith.constant 0 : index
    %4 = vector.load %arg4[%c0_3, %c0_4] : memref<1x128xf32, #tpu.memory_space<vmem>>, vector<1x128xf32>
    %5 = vector.broadcast %4 : vector<1x128xf32> to vector<8x128xf32>
    %6 = arith.addf %3, %5 : vector<8x128xf32>
    %c0_5 = arith.constant 0 : index
    %c0_6 = arith.constant 0 : index
    %7 = vector.load %arg5[%c0_5, %c0_6] : memref<8x128xf32, #tpu.memory_space<vmem>>, vector<8x128xf32>
    tpu.vector_store %arg5[%c0_5, %c0_6], %6 {strides = array<i32>} : memref<8x128xf32, #tpu.memory_space<vmem>>, vector<8x128xf32>,
    return
  }
  func.func @transform_0(%arg0: i32, %arg1: i32) -> (i32, i32) {
    %c0_i32 = arith.constant 0 : i32
    return %arg0, %arg1 : i32, i32
  }
  func.func @transform_1(%arg0: i32, %arg1: i32) -> (i32, i32) {
    %c0_i32 = arith.constant 0 : i32
    %c0_i32_0 = arith.constant 0 : i32
    return %c0_i32, %arg1 : i32, i32
  }
  func.func @transform_2(%arg0: i32, %arg1: i32) -> (i32, i32) {
    %c0_i32 = arith.constant 0 : i32
    %c0_i32_0 = arith.constant 0 : i32
    return %c0_i32, %arg1 : i32, i32
  }
  func.func @transform_3(%arg0: i32, %arg1: i32) -> (i32, i32) {
    %c0_i32 = arith.constant 0 : i32
    return %arg0, %arg1 : i32, i32
  }
}

</mosaic_0001>

<llo_original>
// kernel: tpu_custom_call.1
$region0: #{tpu_custom_call.1}
  #allocation0 [shape = 'u32[]', space=smem, size = 0x4, offset = 0x4, fixed_abs, tag = 'smem constant byte address 0x4 - core index']
  #allocation1 [shape = 'u32[144,128]{1,0:T(1,128)}', space=vmem, size = 0x12000, scoped, tag = 'internal scratch']
  %s0 = inlined_call_operand.hbm [shape: f32[8,128], index: 0, kind: input, shape index: {}]
  %s1 = inlined_call_operand.vmem [shape: f32[1,128], index: 1, kind: input, shape index: {}]
  %s2 = inlined_call_operand.vmem [shape: f32[1,128], index: 2, kind: input, shape index: {}]
  %s3 = inlined_call_operand.hbm [shape: f32[8,128], index: 3, kind: output, shape index: {}]
  %s4 = sld [smem:[#allocation0]]
  $region26: #{tpu_custom_call.1} parent=0
    _
  %s6 = ssub.s32 1, %s4
  %s7 = scalar_select 0, %s6, %s4
  $region1: #{tpu_custom_call.1} parent=0
    #allocation2 [shape = 'u8[4096]{0}', space=vmem, size = 0x1000, scoped, tag = 'input window, operand 0, single buffered']
    #allocation3 [shape = 's32[1]{0}', space=sflag, size = 0x4, scoped, tag = 'scoped memory for tpu_custom_call.1']
    #allocation4 [shape = 's32[1]{0}', space=sflag, size = 0x4, scoped, tag = 'scoped memory for tpu_custom_call.1']
    #allocation5 [shape = 'u8[4096]{0}', space=vmem, size = 0x1000, scoped, tag = 'output window, operand 0, single buffered']
    %8 = vsyncpa [#allocation3], 0
    %9 = vsyncpa [#allocation4], 0
    // Predicated region
    $region2: #{tpu_custom_call.1} parent=1 // pred_check
      _
    $region3: #{tpu_custom_call.1} parent=1 // pred_check_branch
      %11 = sbr.rel (0) target = $region5
    $region4: #{tpu_custom_call.1} parent=1 // pred_region
      %s13 = ssub.s32 128, 128
      %14 = vsyncadd [#allocation3], %s13
      %s16 = sshll.u32 [#allocation2], 4
      %s17 = int_to_ptr.vmem [resolvable:$true] %s16
      %19 = dma.hbm_to_vmem [thread:$0]  %s0, 128, %s17, [#allocation3]
    $region5: #{tpu_custom_call.1} parent=1 // pred_fallthru
      _
    // Predicated region
    $region6: #{tpu_custom_call.1} parent=1 // pred_check
      _
    $region7: #{tpu_custom_call.1} parent=1 // pred_check_branch
      %21 = sbr.rel (0) target = $region9
    $region8: #{tpu_custom_call.1} parent=1 // pred_region
      _
    $region9: #{tpu_custom_call.1} parent=1 // pred_fallthru
      _
    // Predicated region
    $region10: #{tpu_custom_call.1} parent=1 // pred_check
      _
    $region11: #{tpu_custom_call.1} parent=1 // pred_check_branch
      %23 = sbr.rel (0) target = $region13
    $region12: #{tpu_custom_call.1} parent=1 // pred_region
      _
    $region13: #{tpu_custom_call.1} parent=1 // pred_fallthru
      _
    // Predicated region
    $region14: #{tpu_custom_call.1} parent=1 // pred_check
      _
    $region15: #{tpu_custom_call.1} parent=1 // pred_check_branch
      %25 = sbr.rel (0) target = $region17
    $region16: #{tpu_custom_call.1} parent=1 // pred_region
      %26 = dma.done [#allocation3], 128
    $region17: #{tpu_custom_call.1} parent=1 // pred_fallthru
      _
    %v27 = vld [vmem:[#allocation2] sm:$0xff]
    %v28 = vld [vmem:[%s1] sm:$0x1]
    %v30 = vlaneseq
    %v31 = vshrl.u32 %v30, 7
    %v32 = vsub.s32 0, %v31
    %v33 = vrot.slane %v28, %v32
    %v35 = vmul.f32 %v27, %v33
    %v36 = vld [vmem:[%s2] sm:$0x1]
    %v38 = vlaneseq
    %v39 = vshrl.u32 %v38, 7
    %v40 = vsub.s32 0, %v39
    %v41 = vrot.slane %v36, %v40
    %v43 = vadd.f32 %v35, %v41
    %44 = vst [vmem:[#allocation5] sm:$0xff] %v43
    // Predicated region
    $region18: #{tpu_custom_call.1} parent=1 // pred_check
      _
    $region19: #{tpu_custom_call.1} parent=1 // pred_check_branch
      %46 = sbr.rel (0) target = $region21
    $region20: #{tpu_custom_call.1} parent=1 // pred_region
      %s48 = ssub.s32 128, 128
      %49 = vsyncadd [#allocation4], %s48
      %s51 = sshll.u32 [#allocation5], 4
      %s52 = int_to_ptr.vmem [resolvable:$true] %s51
      %54 = dma.vmem_to_hbm [thread:$0]  %s52, 128, %s3, [#allocation4]
    $region21: #{tpu_custom_call.1} parent=1 // pred_fallthru
      _
    // Predicated region
    $region22: #{tpu_custom_call.1} parent=1 // pred_check
      _
    $region23: #{tpu_custom_call.1} parent=1 // pred_check_branch
      %56 = sbr.rel (0) target = $region25
    $region24: #{tpu_custom_call.1} parent=1 // pred_region
      %57 = dma.done [#allocation4], 128
    $region25: #{tpu_custom_call.1} parent=1 // pred_fallthru
      _
    %58 = vsyncpa [#allocation3], 1
    %59 = vsyncpa [#allocation4], 1

</llo_original>
